<compile_context>
chip_gen: v6e
topology: v6e:2x2x1
jax: 0.10.0
libtpu: 0.0.40
codegen_flags: <defaults>
</compile_context>

<pallas_src>
import jax
import jax.numpy as jnp
from jax.experimental import pallas as pl
from jax.experimental.pallas import tpu as pltpu

_VMEM = pltpu.MemorySpace.VMEM
_SMEM = pltpu.MemorySpace.SMEM


def _round_up(n, m):
    return ((n + m - 1) // m) * m


def _pick_tb(batch, d_in, d_out, *, tile_budget_bytes=24 << 20):
    """Largest batch tile whose double-buffered in/out tiles fit the budget,
    capped at ceil(B/2) (rounded to a sublane multiple) so a v7x megacore
    gets >= 2 grid steps to shard whenever the batch allows it."""
    per_row = 2 * d_in * 4 + 2 * max(d_out, 2) * 4   # f32 in + f32 out, 2 bufs
    tb = tile_budget_bytes // max(per_row, 1)
    tb = min(tb, 8192)
    half = _round_up(max((batch + 1) // 2, 1), 8)
    tb = min(tb, half)
    if tb >= batch:
        return batch                      # single block, dims == full array dims
    return max(8, (tb // 8) * 8)          # sublane-aligned tile, partial last block ok


def _binary_kernel(x_ref, wdiff_ref, bdiff_ref, out_ref):
    """output_dim == 2: softmax over 2 classes via sigmoid of the logit diff."""
    x = x_ref[...].astype(wdiff_ref.dtype)                               # in-kernel cast
    d = jnp.dot(x, wdiff_ref[...], preferred_element_type=jnp.float32)   # (TB, 1) f32
    d = d + bdiff_ref[0, 0]                                              # SMEM scalar
    p1 = jax.nn.sigmoid(d)                                               # VPU/EUP, f32
    col = jax.lax.broadcasted_iota(jnp.int32, out_ref.shape, 1)          # (TB, 2)
    out_ref[...] = jnp.where(col == 1, p1, 1.0 - p1).astype(out_ref.dtype)


def _softmax_kernel(x_ref, w_ref, b_ref, out_ref):
    """General output_dim: fused matmul + numerically-stable exact softmax."""
    x = x_ref[...].astype(w_ref.dtype)                                   # in-kernel cast
    logits = jnp.dot(x, w_ref[...], preferred_element_type=jnp.float32)  # (TB, D_out)
    logits = logits + b_ref[...]                                         # (1, D_out) bcast
    m = jnp.max(logits, axis=-1, keepdims=True)
    e = jnp.exp(logits - m)
    denom = jnp.sum(e, axis=-1, keepdims=True)
    out_ref[...] = (e / denom).astype(out_ref.dtype)                     # exact normalize


def make_link_predictor(w1, b1, w2, b2, *, use_bf16=True):
    """Fold the two activation-free linears once and return a forward closure.

    w1: (D_in, H)   -- torch fc1.weight, pre-transposed
    b1: (H,)
    w2: (H, D_out)  -- torch fc2.weight, pre-transposed
    b2: (D_out,)
    """
    d_in = w1.shape[0]
    d_out = w2.shape[1]
    mm_dtype = jnp.bfloat16 if use_bf16 else jnp.float32

    w_eff = jnp.dot(w1, w2)                      # (D_in, D_out) f32
    b_eff = jnp.dot(b1, w2) + b2                 # (D_out,)      f32

    if d_out == 2:
        w_k = (w_eff[:, 1:2] - w_eff[:, 0:1]).astype(mm_dtype)          # (D_in, 1)
        b_k = (b_eff[1] - b_eff[0]).reshape(1, 1).astype(jnp.float32)   # SMEM scalar
    else:
        w_k = w_eff.astype(mm_dtype)                                    # (D_in, D_out)
        b_k = b_eff.reshape(1, -1).astype(jnp.float32)                  # (1, D_out)

    cparams = pltpu.CompilerParams(
        dimension_semantics=("parallel",),
        vmem_limit_bytes=32 * 1024 * 1024,
    )

    def forward(x):
        assert x.ndim == 2 and x.shape[1] == d_in
        batch = x.shape[0]
        tb = _pick_tb(batch, d_in, d_out)
        grid = (pl.cdiv(batch, tb),)

        if d_out == 2:
            return pl.pallas_call(
                _binary_kernel,
                out_shape=jax.ShapeDtypeStruct((batch, 2), jnp.float32),
                grid=grid,
                in_specs=[
                    pl.BlockSpec((tb, d_in), lambda i: (i, 0), memory_space=_VMEM),
                    pl.BlockSpec((d_in, 1), lambda i: (0, 0), memory_space=_VMEM),
                    pl.BlockSpec((1, 1), lambda i: (0, 0), memory_space=_SMEM),
                ],
                out_specs=pl.BlockSpec((tb, 2), lambda i: (i, 0), memory_space=_VMEM),
                compiler_params=cparams,
            )(x, w_k, b_k)

        return pl.pallas_call(
            _softmax_kernel,
            out_shape=jax.ShapeDtypeStruct((batch, d_out), jnp.float32),
            grid=grid,
            in_specs=[
                pl.BlockSpec((tb, d_in), lambda i: (i, 0), memory_space=_VMEM),
                pl.BlockSpec((d_in, d_out), lambda i: (0, 0), memory_space=_VMEM),
                pl.BlockSpec((1, d_out), lambda i: (0, 0), memory_space=_VMEM),
            ],
            out_specs=pl.BlockSpec((tb, d_out), lambda i: (i, 0), memory_space=_VMEM),
            compiler_params=cparams,
        )(x, w_k, b_k)

    return forward


def link_predictor(x, w1, b1, w2, b2, *, use_bf16=True):
    """One-shot convenience wrapper (re-folds weights on every call; prefer
    make_link_predictor() for repeated inference)."""
    return make_link_predictor(w1, b1, w2, b2, use_bf16=use_bf16)(x)


if __name__ == "__main__":
    # Small shapes consistent with the module's forward: x is (batch, input_dim).
    batch, input_dim, hidden_dim = 8, 32, 64

    key = jax.random.PRNGKey(0)
    kx, kw1, kb1, kw2, kb2 = jax.random.split(key, 5)

    x = jax.random.normal(kx, (batch, input_dim), dtype=jnp.float32)
    w1 = jax.random.normal(kw1, (input_dim, hidden_dim), dtype=jnp.float32) * 0.1
    b1 = jax.random.normal(kb1, (hidden_dim,), dtype=jnp.float32) * 0.1

    # --- default output_dim == 2 path (sigmoid formulation) ---
    w2 = jax.random.normal(kw2, (hidden_dim, 2), dtype=jnp.float32) * 0.1
    b2 = jax.random.normal(kb2, (2,), dtype=jnp.float32) * 0.1
    fwd2 = make_link_predictor(w1, b1, w2, b2)
    probs = jax.block_until_ready(fwd2(x))
    probs_ref = jax.nn.softmax((x @ w1 + b1) @ w2 + b2, axis=1)
    assert probs.shape == (batch, 2)
    assert jnp.allclose(probs, probs_ref, atol=1e-2, rtol=1e-2), (
        float(jnp.max(jnp.abs(probs - probs_ref))))
    assert jnp.allclose(jnp.sum(probs, axis=1), 1.0, atol=1e-3)

    # --- general (output_dim != 2) unpadded softmax path ---
    out_dim_g = 6
    kw2g, kb2g = jax.random.split(kw2)
    w2g = jax.random.normal(kw2g, (hidden_dim, out_dim_g), dtype=jnp.float32) * 0.1
    b2g = jax.random.normal(kb2g, (out_dim_g,), dtype=jnp.float32) * 0.1
    fwd6 = make_link_predictor(w1, b1, w2g, b2g)
    probs_g = jax.block_until_ready(fwd6(x))
    probs_g_ref = jax.nn.softmax((x @ w1 + b1) @ w2g + b2g, axis=1)
    assert probs_g.shape == (batch, out_dim_g)
    assert jnp.allclose(probs_g, probs_g_ref, atol=1e-2, rtol=1e-2), (
        float(jnp.max(jnp.abs(probs_g - probs_g_ref))))
    assert jnp.allclose(jnp.sum(probs_g, axis=1), 1.0, atol=1e-3)

    print("KERNEL_OK")
</pallas_src>

<mosaic_0001>
module attributes {stable_mosaic.version = 11 : i64} {
  func.func @_binary_kernel(%arg0: i32, %arg1: memref<8x32xf32, #tpu.memory_space<vmem>>, %arg2: memref<32x1xbf16, #tpu.memory_space<vmem>>, %arg3: memref<1x1xf32, #tpu.memory_space<smem>>, %arg4: memref<8x2xf32, #tpu.memory_space<vmem>>) attributes {dimension_semantics = [#tpu.dimension_semantics<parallel>], iteration_bounds = array<i64: 1>, scalar_prefetch = 0 : i64, scratch_operands = 0 : i64, tpu.core_type = #tpu.core_type<tc>, window_params = [{transform_indices = @transform_0, window_bounds = array<i64: 8, 32>}, {pipeline_mode = #tpu.pipeline_mode<synchronous>, transform_indices = @transform_1, window_bounds = array<i64: 32, 1>}, {transform_indices = @transform_2, window_bounds = array<i64: 1, 1>}, {transform_indices = @transform_3, window_bounds = array<i64: 8, 2>}]} {
    %c0 = arith.constant 0 : index
    %c0_0 = arith.constant 0 : index
    %0 = vector.load %arg1[%c0, %c0_0] : memref<8x32xf32, #tpu.memory_space<vmem>>, vector<8x32xf32>
    %1 = arith.truncf %0 : vector<8x32xf32> to vector<8x32xbf16>
    %c0_1 = arith.constant 0 : index
    %c0_2 = arith.constant 0 : index
    %2 = vector.load %arg2[%c0_1, %c0_2] : memref<32x1xbf16, #tpu.memory_space<vmem>>, vector<32x1xbf16>
    %cst = arith.constant dense<0.000000e+00> : vector<8x1xf32>
    %3 = tpu.matmul %1, %2, %cst {dimension_numbers = #tpu.dot_dimension_numbers<[1], [0], [0], [1], [0, 0, 1, 1], [], []>} : vector<8x32xbf16>, vector<32x1xbf16>, vector<8x1xf32> -> vector<8x1xf32>
    %c0_3 = arith.constant 0 : index
    %c0_4 = arith.constant 0 : index
    %4 = memref.load %arg3[%c0_3, %c0_4] : memref<1x1xf32, #tpu.memory_space<smem>>
    %5 = vector.broadcast %4 : f32 to vector<8x1xf32>
    %6 = arith.addf %3, %5 : vector<8x1xf32>
    %7 = arith.negf %6 : vector<8x1xf32>
    %8 = math.exp %7 : vector<8x1xf32>
    %cst_5 = arith.constant 1.000000e+00 : f32
    %9 = vector.broadcast %cst_5 : f32 to vector<8x1xf32>
    %10 = arith.addf %9, %8 : vector<8x1xf32>
    %11 = arith.divf %9, %10 : vector<8x1xf32>
    %12 = tpu.iota {dimensions = array<i32: 1>} : vector<8x2xi32>
    %c1_i32 = arith.constant 1 : i32
    %13 = vector.broadcast %c1_i32 : i32 to vector<8x2xi32>
    %14 = arith.cmpi eq, %12, %13 : vector<8x2xi32>
    %cst_6 = arith.constant 1.000000e+00 : f32
    %15 = vector.broadcast %cst_6 : f32 to vector<8x1xf32>
    %16 = arith.subf %15, %11 : vector<8x1xf32>
    %17 = vector.shape_cast %11 : vector<8x1xf32> to vector<8x1xf32>
    %18 = vector.broadcast %17 : vector<8x1xf32> to vector<8x2xf32>
    %19 = vector.shape_cast %16 : vector<8x1xf32> to vector<8x1xf32>
    %20 = vector.broadcast %19 : vector<8x1xf32> to vector<8x2xf32>
    %21 = arith.select %14, %18, %20 : vector<8x2xi1>, vector<8x2xf32>
    %c0_7 = arith.constant 0 : index
    %c0_8 = arith.constant 0 : index
    %22 = vector.load %arg4[%c0_7, %c0_8] : memref<8x2xf32, #tpu.memory_space<vmem>>, vector<8x2xf32>
    tpu.vector_store %arg4[%c0_7, %c0_8], %21 {strides = array<i32>} : memref<8x2xf32, #tpu.memory_space<vmem>>, vector<8x2xf32>,
    return
  }
  func.func @transform_0(%arg0: i32) -> (i32, i32) {
    %c0_i32 = arith.constant 0 : i32
    %c0_i32_0 = arith.constant 0 : i32
    return %arg0, %c0_i32 : i32, i32
  }
  func.func @transform_1(%arg0: i32) -> (i32, i32) {
    %c0_i32 = arith.constant 0 : i32
    %c0_i32_0 = arith.constant 0 : i32
    %c0_i32_1 = arith.constant 0 : i32
    return %c0_i32, %c0_i32_0 : i32, i32
  }
  func.func @transform_2(%arg0: i32) -> (i32, i32) {
    %c0_i32 = arith.constant 0 : i32
    %c0_i32_0 = arith.constant 0 : i32
    %c0_i32_1 = arith.constant 0 : i32
    return %c0_i32, %c0_i32_0 : i32, i32
  }
  func.func @transform_3(%arg0: i32) -> (i32, i32) {
    %c0_i32 = arith.constant 0 : i32
    %c0_i32_0 = arith.constant 0 : i32
    return %arg0, %c0_i32 : i32, i32
  }
}

</mosaic_0001>

<llo_original>
// kernel: tpu_custom_call.1
$region0: #{tpu_custom_call.1}
  #allocation0 [shape = 'u32[]', space=smem, size = 0x4, offset = 0x4, fixed_abs, tag = 'smem constant byte address 0x4 - core index']
  #allocation1 [shape = 'u32[144,128]{1,0:T(1,128)}', space=vmem, size = 0x12000, scoped, tag = 'internal scratch']
  #allocation2 [shape = 'f32[1,1]{1,0:T(1,128)S(6)}', space=smem, size = 0x200, scoped, tag = 'scoped memory for tpu_custom_call.1']
  %s0 = inlined_call_operand.vmem [shape: f32[8,32], index: 0, kind: input, shape index: {}]
  %s1 = inlined_call_operand.vmem [shape: bf16[32,1], index: 1, kind: input, shape index: {}]
  %s2 = inlined_call_operand.<no memory space> [shape: f32[1,1], index: 2, kind: input, shape index: {}]
  %s3 = inlined_call_operand.vmem [shape: f32[8,2], index: 3, kind: output, shape index: {}]
  %s4 = sld [smem:[#allocation0]]
  $region22: #{tpu_custom_call.1} parent=0
    _
  %s6 = ssub.s32 1, %s4
  %s7 = scalar_select 0, %s6, %s4
  %8 = sst [smem:[#allocation2]] %s2
  // Predicated region
  $region2: #{tpu_custom_call.1} parent=0 // pred_check
    _
  $region3: #{tpu_custom_call.1} parent=0 // pred_check_branch
    %10 = sbr.rel (0) target = $region5
  $region4: #{tpu_custom_call.1} parent=0 // pred_region
    _
  $region5: #{tpu_custom_call.1} parent=0 // pred_fallthru
    _
  // Predicated region
  $region6: #{tpu_custom_call.1} parent=0 // pred_check
    _
  $region7: #{tpu_custom_call.1} parent=0 // pred_check_branch
    %12 = sbr.rel (0) target = $region9
  $region8: #{tpu_custom_call.1} parent=0 // pred_region
    _
  $region9: #{tpu_custom_call.1} parent=0 // pred_fallthru
    _
  // Predicated region
  $region10: #{tpu_custom_call.1} parent=0 // pred_check
    _
  $region11: #{tpu_custom_call.1} parent=0 // pred_check_branch
    %14 = sbr.rel (0) target = $region13
  $region12: #{tpu_custom_call.1} parent=0 // pred_region
    _
  $region13: #{tpu_custom_call.1} parent=0 // pred_fallthru
    _
  %v16 = vld [vmem:[%s0] sm:$0xff]
  %v17 = vpack.c.bf16 %v16, %v16
  %v18 = vld [vmem:[%s1] sm:$0xf]
  %v19 = vld [vmem:[%s1 + $0x4] sm:$0xf]
  %v20 = vld [vmem:[%s1 + $0x8] sm:$0xf]
  %v21 = vld [vmem:[%s1 + $0xc] sm:$0xf]
  %s22 = sld [smem:[#allocation2]]
  %v23 = vstv %s22
  %v28 = vunpack.c.l.b16 %v18
  %v29 = vunpack.c.l.b16 %v19
  %v30 = vunpack.c.l.b16 %v20
  %v31 = vunpack.c.l.b16 %v21
  %v32 = vpack.c.b16 %v29, %v28
  %v33 = vpack.c.b16 %v31, %v30
  %vm36 = vcmask 261120
  %v38 = vsel %vm36, %v17, 0
  %40 = vmatprep.subr.bf16.mxu0 0
  %41 = vmatpush1.bf16.msra.mxu0 0
  %42 = vmatprep.subr.bf16.mxu0 0
  %43 = vmatpush1.bf16.msra.mxu0 0
  %44 = vmatprep.subr.bf16.mxu0 0
  %45 = vmatpush1.bf16.msra.mxu0 0
  %46 = vmatprep.subr.bf16.mxu0 0
  %47 = vmatpush1.bf16.msra.mxu0 0
  %48 = vmatprep.subr.bf16.mxu0 0
  %49 = vmatpush1.bf16.msra.mxu0 0
  %50 = vmatprep.subr.bf16.mxu0 0
  %51 = vmatpush1.bf16.msra.mxu0 0
  %52 = vmatprep.subr.bf16.mxu0 0
  %53 = vmatpush1.bf16.msra.mxu0 %v33
  %54 = vmatprep.subr.bf16.mxu0 0
  %55 = vmatpush1.bf16.msra.mxu0 %v32
  %56 = vmatprep.subr.bf16.mxu0 0
  %57 = vmatpush2.bf16.msra.mxu0 0
  %58 = vmatprep.subr.bf16.mxu0 0
  %59 = vmatpush2.bf16.msra.mxu0 0
  %60 = vmatprep.subr.bf16.mxu0 0
  %61 = vmatpush2.bf16.msra.mxu0 0
  %62 = vmatprep.subr.bf16.mxu0 0
  %63 = vmatpush2.bf16.msra.mxu0 0
  %64 = vmatprep.subr.bf16.mxu0 0
  %65 = vmatpush2.bf16.msra.mxu0 0
  %66 = vmatprep.subr.bf16.mxu0 0
  %67 = vmatpush2.bf16.msra.mxu0 0
  %68 = vmatprep.subr.bf16.mxu0 0
  %69 = vmatpush2.bf16.msra.mxu0 0
  %70 = vmatprep.subr.bf16.mxu0 0
  %71 = vmatpush2.bf16.msra.mxu0 0
  %72 = vmatprep.mubr.bf16.mxu0 0
  %73 = vmatmul.mubr.bf16.gmra.mxu0 %v38
  %v74 = vpop.f32.mrf.mxu0
  %v75 = vadd.f32 %v23, %v74
  %v76 = vpop.f32.mrf.mxu0
  %v77 = vpop.f32.mrf.mxu0
  %v78 = vpop.f32.mrf.mxu0
  %79 = vdwg.mxu0
  %v80 = vxor.u32 %v75, 2147483648
  %v81 = vmul.f32 %v80, 1.442695
  %v82 = vpow.pop %v81
  %v83 = vadd.f32 %v82, 1.0
  %v84 = vrcp.pop %v83
  %v85 = vmul.f32 1.0, %v84
  %v86 = vlaneseq
  %v87 = vand.u32 %v86, 127
  %vm88 = vcmp.eq.s32.totalorder %v87, 1
  %v89 = vsub.f32 1.0, %v85
  %91 = vset.pattern.permute.xlu0 0
  %92 = vperm.xlu0 %91, %v85
  %v93 = vpop.permute.xlu0 %92
  %96 = vset.pattern.permute.xlu0 0
  %97 = vperm.xlu0 %96, %v89
  %v98 = vpop.permute.xlu0 %97
  %v100 = vsel %vm88, %v93, %v98
  %vm101 = vcmask 15360
  %102 = vst.msk [vmem:[%s3] sm:$0xff] %vm101, %v100
  // Predicated region
  $region14: #{tpu_custom_call.1} parent=0 // pred_check
    _
  $region15: #{tpu_custom_call.1} parent=0 // pred_check_branch
    %104 = sbr.rel (0) target = $region17
  $region16: #{tpu_custom_call.1} parent=0 // pred_region
    _
  $region17: #{tpu_custom_call.1} parent=0 // pred_fallthru
    _
  // Predicated region
  $region18: #{tpu_custom_call.1} parent=0 // pred_check
    _
  $region19: #{tpu_custom_call.1} parent=0 // pred_check_branch
    %106 = sbr.rel (0) target = $region21
  $region20: #{tpu_custom_call.1} parent=0 // pred_region
    _
  $region21: #{tpu_custom_call.1} parent=0 // pred_fallthru
    _

</llo_original>
